<compile_context>
chip_gen: v7x
topology: tpu7x:2x2x1
jax: 0.10.0
libtpu: 0.0.40
codegen_flags: <defaults>
</compile_context>

<pallas_src>
import functools

import numpy as np
import jax
import jax.numpy as jnp
from jax.experimental import pallas as pl
from jax.experimental.pallas import tpu as pltpu


# TODO(synk): common.util.create_distance_node_matrix is not provided in the
# source; it is reproduced here as the relative-distance matrix d[i, j] = -|i - j|
# (the usual graph-attention distance bias in this codebase family).
def _distance_node_matrix_ref(n):
    idx = np.arange(n)
    return -np.abs(idx[:, None] - idx[None, :]).astype(np.float32)


def _round_up(x, m):
    return ((x + m - 1) // m) * m


def _cdiv(a, b):
    return -(-a // b)


def _vmem_budgets():
    """Generation-aware (block_budget, row_tile_budget, vmem_limit) in bytes."""
    try:
        cap = int(getattr(pltpu.get_tpu_info(), "vmem_capacity_bytes",
                          64 * 1024 * 1024))
    except Exception:
        cap = 64 * 1024 * 1024          # unknown -> assume v7x-sized VMEM
    if cap >= 96 * 1024 * 1024:         # v5e / v6e: 128 MiB physical VMEM
        return 24 << 20, 2 << 20, 64 << 20
    return 10 << 20, 1 << 20, 40 << 20  # v7x: 64 MiB per TensorCore


def _pick_tiles(batch, size, s_pad, itemsize, sub, block_budget, row_budget):
    """Choose (tile_b, tile_r, B_pad, r_pad)."""
    r_pad = _round_up(max(size, sub), sub)          # sublane-only padding
    # Cap rows per tile so the (tile_r, s_pad) f32 temporaries (dist + masks)
    # stay small; the batch dimension (tile_b) supplies the block size.
    max_rows = max(sub, (row_budget // (s_pad * 4)) // sub * sub)
    if max_rows >= r_pad:
        n_r, tile_r = 1, r_pad
    else:
        n_r = _cdiv(r_pad, max_rows)
        tile_r = _round_up(_cdiv(r_pad, n_r), sub)
    r_pad = tile_r * n_r

    tile_b = max(1, min(batch, block_budget // (tile_r * s_pad * itemsize)))
    B_pad = _round_up(batch, tile_b)

    # Guarantee >= 2 grid steps (when splittable) so both v7x TensorCores get
    # work; one extra ~0.35us step is harmless on 1-TC chips.
    if (B_pad // tile_b) * n_r == 1:
        if tile_b >= 2:
            tile_b = _cdiv(tile_b, 2)
            B_pad = _round_up(batch, tile_b)
        elif tile_r >= 2 * sub:
            n_r = 2
            tile_r = _round_up(_cdiv(r_pad, 2), sub)
            r_pad = tile_r * 2
    return tile_b, tile_r, B_pad, r_pad


def _distance_kernel(len1_ref, len2_ref, out_ref, *, tile_b, tile_r, s_pad,
                     logical_size, summary_node, unroll):
    """Writes a (tile_b, tile_r, s_pad) block of the distance-bias matrix."""
    bi = pl.program_id(0)
    ri = pl.program_id(1)
    base_b = bi * tile_b
    base_r = ri * tile_r

    # 1-D index vectors; only `dist` is a full (tile_r, s_pad) tensor and it is
    # computed once per grid step, shared by every batch row of the block.
    row = base_r + jax.lax.broadcasted_iota(jnp.int32, (tile_r, 1), 0)
    col = jax.lax.broadcasted_iota(jnp.int32, (1, s_pad), 1)
    dist = -jnp.abs(row - col).astype(jnp.float32)      # (tile_r, s_pad)
    neg_inf = jnp.float32(-jnp.inf)
    zero = jnp.float32(0.0)

    def write_row(t):
        l1 = len1_ref[base_b + t]
        l2 = len2_ref[base_b + t]
        start2 = l1 + 1
        end2 = start2 + l2

        # Cheap 1-D "sentence id" vectors: 0 = sentence1, 1 = sentence2,
        # -1 = separator / padding.  A cell is a distance cell iff row and
        # column share a non-negative sentence id.
        row_sid = jnp.where(row < l1, 0,
                            jnp.where((row >= start2) & (row < end2), 1, -1))
        col_sid = jnp.where(col < l1, 0,
                            jnp.where((col >= start2) & (col < end2), 1, -1))
        row_ok = row_sid >= 0                           # (tile_r, 1)

        valid = (row_sid == col_sid) & row_ok           # 2 full-tile ops
        if summary_node:
            # sentence1 rows -> column size-2, sentence2 rows -> column size-1
            target_col = (logical_size - 2) + row_sid   # (tile_r, 1), cheap
            summ = (col == target_col) & row_ok         # 2 full-tile ops
            fill = jnp.where(summ, zero, neg_inf)       # 1 full-tile select
        else:
            fill = neg_inf
        out_ref[t] = jnp.where(valid, dist, fill).astype(out_ref.dtype)

    if unroll:
        for t in range(tile_b):                         # small static unroll
            write_row(t)
    else:
        def body(t, carry):                             # bounded live ranges
            write_row(t)
            return carry
        jax.lax.fori_loop(0, tile_b, body, 0)


def build_distance_matrix(len1, len2, logical_size, summary_node=False,
                          out_dtype=jnp.float32, return_padded=False):
    """len1, len2: int32[B] sentence lengths. Returns out_dtype[B, size, size]."""
    B = int(len1.shape[0])
    logical_size = int(logical_size)
    itemsize = jnp.dtype(out_dtype).itemsize
    sub = 8 * max(1, 4 // itemsize)                 # 8 for f32, 16 for bf16
    s_pad = _round_up(max(logical_size, 1), 128)    # lane-dense last dim
    block_budget, row_budget, vmem_limit = _vmem_budgets()
    tile_b, tile_r, B_pad, r_pad = _pick_tiles(
        B, logical_size, s_pad, itemsize, sub, block_budget, row_budget)

    len1 = jnp.asarray(len1, jnp.int32)
    len2 = jnp.asarray(len2, jnp.int32)
    if B_pad != B:
        pad = jnp.zeros((B_pad - B,), jnp.int32)
        len1 = jnp.concatenate([len1, pad])
        len2 = jnp.concatenate([len2, pad])

    unroll = tile_b <= 4
    kernel = functools.partial(
        _distance_kernel, tile_b=tile_b, tile_r=tile_r, s_pad=s_pad,
        logical_size=logical_size, summary_node=summary_node, unroll=unroll)

    grid = (B_pad // tile_b, r_pad // tile_r)
    out_bytes = B_pad * r_pad * s_pad * itemsize

    dm_padded = pl.pallas_call(
        kernel,
        out_shape=jax.ShapeDtypeStruct((B_pad, r_pad, s_pad), out_dtype),
        grid_spec=pltpu.PrefetchScalarGridSpec(
            num_scalar_prefetch=2,
            grid=grid,
            in_specs=[],
            out_specs=pl.BlockSpec((tile_b, tile_r, s_pad),
                                   lambda bi, ri, l1, l2: (bi, ri, 0)),
        ),
        compiler_params=pltpu.CompilerParams(
            dimension_semantics=("parallel", "parallel"),
            vmem_limit_bytes=vmem_limit),
        cost_estimate=pl.CostEstimate(
            flops=4 * B_pad * r_pad * s_pad,   # compares/selects, advisory
            transcendentals=0,
            bytes_accessed=out_bytes),
    )(len1, len2)

    if return_padded:
        # TODO(synk): downstream attention stacks that already pad S can consume
        # this (B_pad, r_pad, s_pad) bias directly and skip the de-pad copy
        # (padded rows/cols are -inf and must be masked/ignored by the consumer).
        return dm_padded
    if B_pad == B and r_pad == logical_size and s_pad == logical_size:
        return dm_padded
    return dm_padded[:B, :logical_size, :logical_size]


class PreprocessWrapperPallas:
    """JAX/Pallas port of PreprocessWrapper."""

    def __init__(self, m, pad_idx, character_pad_idx, summary_node=False):
        # TODO(synk): `m` is an externally injected sub-module (not defined in
        # the source file); it is passed through unchanged.
        self.m = m
        self._pad_idx = pad_idx
        self._character_pad_idx = character_pad_idx
        self._summary_node = summary_node

    def __call__(self, batch_data):
        return self.m(*self._preprocess(batch_data))

    def _preprocess(self, batch_data):
        s1 = batch_data['s1']
        s2 = batch_data['s2']
        s1_char = batch_data['s1_char']
        s2_char = batch_data['s2_char']
        batch_size = len(s1)

        size = max(len(t1) + len(t2) + 1 for t1, t2 in zip(s1, s2))
        if self._summary_node:
            size += 2

        # ----- ragged token padding (host-side glue, equivalent to PaddedList) -----
        sentences = np.full((batch_size, size), self._pad_idx, dtype=np.int32)
        for i, (t1, t2) in enumerate(zip(s1, s2)):
            merged = list(t1) + [self._pad_idx] + list(t2)
            if self._summary_node:
                merged = merged + [self._pad_idx, self._pad_idx]
            sentences[i, :len(merged)] = merged

        max_char = max(
            max((len(c) for c in (list(c1) + [[self._character_pad_idx]] + list(c2))),
                default=1)
            for c1, c2 in zip(s1_char, s2_char))
        sentences_char = np.full((batch_size, size, max_char),
                                 self._character_pad_idx, dtype=np.int32)
        for i, (c1, c2) in enumerate(zip(s1_char, s2_char)):
            merged = list(c1) + [[self._character_pad_idx]] + list(c2)
            if self._summary_node:
                merged = merged + [[self._character_pad_idx],
                                   [self._character_pad_idx]]
            for j, chars in enumerate(merged):
                sentences_char[i, j, :len(chars)] = chars

        # ----- distance matrix: the hot path, computed in the Pallas kernel -----
        len1 = jnp.asarray([len(t) for t in s1], dtype=jnp.int32)
        len2 = jnp.asarray([len(t) for t in s2], dtype=jnp.int32)
        distance_matrix = build_distance_matrix(
            len1, len2, size, summary_node=self._summary_node)

        return (jnp.asarray(sentences), jnp.asarray(sentences_char), distance_matrix)


def _reference_distance_matrix(s1, s2, size, summary_node=False):
    """Pure-numpy port of the original PyTorch loop, for verification."""
    B = len(s1)
    dm = np.ones((B, size, size), dtype=np.float32) * float('-inf')
    for i, (t1, t2) in enumerate(zip(s1, s2)):
        m1 = _distance_node_matrix_ref(len(t1))
        m2 = _distance_node_matrix_ref(len(t2))
        dm[i, :len(t1), :len(t1)] = m1
        dm[i, len(t1) + 1:len(t1) + len(t2) + 1,
              len(t1) + 1:len(t1) + len(t2) + 1] = m2
        if summary_node:
            dm[i, :len(t1), -2] = 0
            dm[i, len(t1) + 1:len(t1) + len(t2) + 1, -1] = 0
    return dm


def _check_case(s1, s2, s1_char, s2_char, summary_node):
    batch_data = {'s1': s1, 's2': s2, 's1_char': s1_char, 's2_char': s2_char}
    identity_m = lambda sents, sents_char, dist: (sents, sents_char, dist)
    wrapper = PreprocessWrapperPallas(identity_m, pad_idx=0, character_pad_idx=0,
                                      summary_node=summary_node)
    sentences, sentences_char, distance_matrix = wrapper(batch_data)
    jax.block_until_ready(distance_matrix)

    size = max(len(a) + len(b) + 1 for a, b in zip(s1, s2))
    if summary_node:
        size += 2
    assert sentences.shape == (len(s1), size)
    assert distance_matrix.shape == (len(s1), size, size)

    ref = _reference_distance_matrix(s1, s2, size, summary_node=summary_node)
    got = np.asarray(distance_matrix)
    finite = np.isfinite(ref)
    assert np.array_equal(np.isfinite(got), finite), "-inf pattern mismatch"
    np.testing.assert_allclose(got[finite], ref[finite], rtol=0, atol=0)


def _make_batch(key, lens1, lens2, vocab=50, char_vocab=20):
    s1, s2 = [], []
    for n in lens1:
        key, sub = jax.random.split(key)
        s1.append([int(v) for v in np.asarray(jax.random.randint(sub, (n,), 1, vocab))])
    for n in lens2:
        key, sub = jax.random.split(key)
        s2.append([int(v) for v in np.asarray(jax.random.randint(sub, (n,), 1, vocab))])
    s1_char = [[[t % char_vocab + 1, (t * 3) % char_vocab + 1] for t in sent]
               for sent in s1]
    s2_char = [[[t % char_vocab + 1, (t * 3) % char_vocab + 1] for t in sent]
               for sent in s2]
    return s1, s2, s1_char, s2_char


if __name__ == "__main__":
    key = jax.random.PRNGKey(0)

    # small deterministic ragged batch: batch=2
    s1, s2, s1c, s2c = _make_batch(key, lens1=[5, 7], lens2=[6, 4])
    _check_case(s1, s2, s1c, s2c, summary_node=False)
    _check_case(s1, s2, s1c, s2c, summary_node=True)

    # larger batch=10 exercises the fori_loop (tile_b > 4) path
    key2 = jax.random.PRNGKey(0)
    lens1 = [3, 5, 7, 4, 6, 2, 8, 5, 3, 6]
    lens2 = [4, 2, 6, 5, 3, 7, 2, 4, 6, 3]
    s1, s2, s1c, s2c = _make_batch(key2, lens1=lens1, lens2=lens2)
    _check_case(s1, s2, s1c, s2c, summary_node=False)
    _check_case(s1, s2, s1c, s2c, summary_node=True)

    print("KERNEL_OK")
</pallas_src>

<mosaic_0001>
module attributes {stable_mosaic.version = 11 : i64} {
  func.func @_distance_kernel(%arg0: i32, %arg1: i32, %arg2: memref<2xi32, #tpu.memory_space<smem>>, %arg3: memref<2xi32, #tpu.memory_space<smem>>, %arg4: memref<1x16x128xf32, #tpu.memory_space<vmem>>) attributes {dimension_semantics = [#tpu.dimension_semantics<parallel>, #tpu.dimension_semantics<parallel>], iteration_bounds = array<i64: 2, 1>, scalar_prefetch = 2 : i64, scratch_operands = 0 : i64, tpu.core_type = #tpu.core_type<tc>, window_params = [{transform_indices = @transform_0, window_bounds = array<i64: 1, 16, 128>}]} {
    %c1_i32 = arith.constant 1 : i32
    %0 = arith.muli %arg0, %c1_i32 : i32
    %c16_i32 = arith.constant 16 : i32
    %1 = arith.muli %arg1, %c16_i32 : i32
    %2 = tpu.iota {dimensions = array<i32: 0>} : vector<16x1xi32>
    %3 = vector.broadcast %1 : i32 to vector<16x1xi32>
    %4 = arith.addi %3, %2 : vector<16x1xi32>
    %5 = tpu.iota {dimensions = array<i32: 1>} : vector<1x128xi32>
    %6 = vector.broadcast %4 : vector<16x1xi32> to vector<16x128xi32>
    %7 = vector.broadcast %5 : vector<1x128xi32> to vector<16x128xi32>
    %8 = arith.subi %6, %7 : vector<16x128xi32>
    %9 = math.absi %8 : vector<16x128xi32>
    %10 = arith.sitofp %9 : vector<16x128xi32> to vector<16x128xf32>
    %cst = arith.constant 0.000000e+00 : f32
    %11 = vector.broadcast %cst : f32 to vector<16x128xf32>
    %12 = arith.subf %11, %10 : vector<16x128xf32>
    %c0_i32 = arith.constant 0 : i32
    %13 = arith.addi %0, %c0_i32 : i32
    %14 = arith.index_cast %13 : i32 to index
    %15 = memref.load %arg2[%14] : memref<2xi32, #tpu.memory_space<smem>>
    %c0_i32_0 = arith.constant 0 : i32
    %16 = arith.addi %0, %c0_i32_0 : i32
    %17 = arith.index_cast %16 : i32 to index
    %18 = memref.load %arg3[%17] : memref<2xi32, #tpu.memory_space<smem>>
    %c1_i32_1 = arith.constant 1 : i32
    %19 = arith.addi %15, %c1_i32_1 : i32
    %20 = arith.addi %19, %18 : i32
    %21 = vector.broadcast %15 : i32 to vector<16x1xi32>
    %22 = arith.cmpi slt, %4, %21 : vector<16x1xi32>
    %23 = vector.broadcast %19 : i32 to vector<16x1xi32>
    %24 = arith.cmpi sge, %4, %23 : vector<16x1xi32>
    %25 = vector.broadcast %20 : i32 to vector<16x1xi32>
    %26 = arith.cmpi slt, %4, %25 : vector<16x1xi32>
    %27 = arith.andi %24, %26 : vector<16x1xi1>
    %c1_i32_2 = arith.constant 1 : i32
    %c-1_i32 = arith.constant -1 : i32
    %28 = vector.broadcast %c1_i32_2 : i32 to vector<16x1xi32>
    %29 = vector.broadcast %c-1_i32 : i32 to vector<16x1xi32>
    %30 = arith.select %27, %28, %29 : vector<16x1xi1>, vector<16x1xi32>
    %c0_i32_3 = arith.constant 0 : i32
    %31 = vector.broadcast %c0_i32_3 : i32 to vector<16x1xi32>
    %32 = arith.select %22, %31, %30 : vector<16x1xi1>, vector<16x1xi32>
    %33 = vector.broadcast %15 : i32 to vector<1x128xi32>
    %34 = arith.cmpi slt, %5, %33 : vector<1x128xi32>
    %35 = vector.broadcast %19 : i32 to vector<1x128xi32>
    %36 = arith.cmpi sge, %5, %35 : vector<1x128xi32>
    %37 = vector.broadcast %20 : i32 to vector<1x128xi32>
    %38 = arith.cmpi slt, %5, %37 : vector<1x128xi32>
    %39 = arith.andi %36, %38 : vector<1x128xi1>
    %c1_i32_4 = arith.constant 1 : i32
    %c-1_i32_5 = arith.constant -1 : i32
    %40 = vector.broadcast %c1_i32_4 : i32 to vector<1x128xi32>
    %41 = vector.broadcast %c-1_i32_5 : i32 to vector<1x128xi32>
    %42 = arith.select %39, %40, %41 : vector<1x128xi1>, vector<1x128xi32>
    %c0_i32_6 = arith.constant 0 : i32
    %43 = vector.broadcast %c0_i32_6 : i32 to vector<1x128xi32>
    %44 = arith.select %34, %43, %42 : vector<1x128xi1>, vector<1x128xi32>
    %c0_i32_7 = arith.constant 0 : i32
    %45 = vector.broadcast %c0_i32_7 : i32 to vector<16x1xi32>
    %46 = arith.cmpi sge, %32, %45 : vector<16x1xi32>
    %47 = vector.broadcast %32 : vector<16x1xi32> to vector<16x128xi32>
    %48 = vector.broadcast %44 : vector<1x128xi32> to vector<16x128xi32>
    %49 = arith.cmpi eq, %47, %48 : vector<16x128xi32>
    %50 = vector.broadcast %46 : vector<16x1xi1> to vector<16x128xi1>
    %51 = arith.andi %49, %50 : vector<16x128xi1>
    %cst_8 = arith.constant 0xFF800000 : f32
    %52 = vector.broadcast %cst_8 : f32 to vector<16x128xf32>
    %53 = arith.select %51, %12, %52 : vector<16x128xi1>, vector<16x128xf32>
    %c0 = arith.constant 0 : index
    %c0_9 = arith.constant 0 : index
    %c0_10 = arith.constant 0 : index
    %54 = vector.load %arg4[%c0, %c0_9, %c0_10] : memref<1x16x128xf32, #tpu.memory_space<vmem>>, vector<1x16x128xf32>
    %55 = vector.shape_cast %54 : vector<1x16x128xf32> to vector<16x128xf32>
    %56 = vector.shape_cast %53 : vector<16x128xf32> to vector<1x16x128xf32>
    tpu.vector_store %arg4[%c0, %c0_9, %c0_10], %56 {strides = array<i32>} : memref<1x16x128xf32, #tpu.memory_space<vmem>>, vector<1x16x128xf32>,
    return
  }
  func.func @transform_0(%arg0: i32, %arg1: i32, %arg2: memref<2xi32, #tpu.memory_space<smem>>, %arg3: memref<2xi32, #tpu.memory_space<smem>>) -> (i32, i32, i32) {
    %c0_i32 = arith.constant 0 : i32
    %c0_i32_0 = arith.constant 0 : i32
    return %arg0, %arg1, %c0_i32 : i32, i32, i32
  }
}

</mosaic_0001>

<llo_original>
// kernel: tpu_custom_call.1
$region0: #{tpu_custom_call.1}
  #allocation0 [shape = 'u32[]', space=smem, size = 0x4, offset = 0x4, fixed_abs, tag = 'smem constant byte address 0x4 - core index']
  #allocation1 [shape = 'u32[144,128]{1,0:T(1,128)}', space=vmem, size = 0x12000, scoped, tag = 'internal scratch']
  #allocation2 [shape = 's32[1]{0}', space=sflag, size = 0x4, scoped, tag = 'scoped memory for tpu_custom_call.1']
  #allocation3 [shape = 'u8[512]{0}', space=smem, size = 0x200, scoped, tag = 'prefetched SMEM operand 0']
  #allocation4 [shape = 'u8[512]{0}', space=smem, size = 0x200, scoped, tag = 'prefetched SMEM operand 1']
  %s0 = inlined_call_operand.hbm [shape: s32[2], index: 0, kind: input, shape index: {}]
  %s1 = inlined_call_operand.vmem [shape: s32[2], index: 1, kind: input, shape index: {}]
  %s2 = inlined_call_operand.hbm [shape: f32[2,16,128], index: 2, kind: output, shape index: {}]
  %s3 = sld [smem:[#allocation0]]
  $region25: #{tpu_custom_call.1} parent=0
    _
  %s5 = ssub.s32 1, %s3
  %s6 = scalar_select 0, %s5, %s3
  %8 = dma.hbm_to_smem %s0, 16, [#allocation3], [#allocation2]
  %s9 = sshll.u32 %s1, 4
  %s10 = int_to_ptr.vmem [resolvable:$true] %s9
  %12 = dma.vmem_to_smem %s10, 16, [#allocation4], [#allocation2]
  %13 = dma.done [#allocation2], 32
  %14 = sfence
  $region1: #{tpu_custom_call.1} parent=0
    #allocation5 [shape = 'u8[16384]{0}', space=vmem, size = 0x4000, scoped, tag = 'output window, operand 0']
    #allocation6 [shape = 's32[2]{0}', space=sflag, size = 0x8, scoped, tag = 'scoped memory for tpu_custom_call.1']
    %15 = vsyncpa [#allocation6], 0
    %s16 = scalar_lea.sflag [#allocation6], 1
    %17 = vsyncpa %s16, 0
    loop: start=0, step=1, limit=3
    $region2: #{tpu_custom_call.1} parent=1 // loop_pre_header
      _
    $region3: #{tpu_custom_call.1} parent=1 // loop_header
      %s19 = sphi 0, %s23
      %p20 = scmp.ge.s32.totalorder %s19, 3
      %s25 = sphi 0, %s35
      %s26 = sphi 0, %s31
      %s27 = sphi 0, %s25
      %s28 = sphi 0, %s26
      %s40 = sphi 0, %s42
      %s43 = sphi 0, %s40
      %s53 = sphi 0, %s43
    $region4: #{tpu_custom_call.1} parent=1 // loop_header_branch
      %22 = sbr.rel (%p20) target = $region8
    $region5: #{tpu_custom_call.1} parent=1 // loop_body
      %s24 = ssub.s32 %s19, 1
      %s29 = sadd.s32 1, %s26
      %p30 = scmp.ge.s32.totalorder %s29, 1
      %s31 = scalar_select %p30, 0, %s29
      %s32 = sadd.s32 1, %s25
      %s33 = scalar_select %p30, %s32, %s25
      %p34 = scmp.ge.s32.totalorder %s33, 2
      %s35 = scalar_select %p34, 0, %s33
      %s36 = ssub.s32 %s25, %s35
      %s37 = ssub.s32 %s26, %s31
      %s38 = sor.u32 %s36, %s37
      %p39 = scmp.eq.s32.totalorder %s38, 0
      %s41 = sadd.s32 %s40, 1
      %s42 = scalar_select %p39, %s40, %s41
      %p44 = pneg %p39
      %p45 = scmp.eq.s32.totalorder %s19, 1
      %p46 = por %p44, %p45
      %p47 = scmp.ne.s32.totalorder %s40, %s43
      %p48 = scmp.eq.s32.totalorder %s19, 0
      %p49 = por %p47, %p48
      %p50 = scmp.ne.s32.totalorder %s40, %s43
      %p51 = scmp.eq.s32.totalorder %s24, 1
      %p52 = por %p50, %p51
      %p54 = scmp.ne.s32.totalorder %s43, %s53
      %p55 = scmp.eq.s32.totalorder %s24, 0
      %p56 = por %p54, %p55
      %p57 = scmp.lt.s32.totalorder %s19, 2
      // Predicated region
      $region9: #{tpu_custom_call.1} parent=5 // pred_check
        %p58 = pneg %p57
      $region10: #{tpu_custom_call.1} parent=5 // pred_check_branch
        %60 = sbr.rel (%p58) target = $region12
      $region11: #{tpu_custom_call.1} parent=5 // pred_region
        %p61 = pneg %p49
        %p62 = pneg %p46
        %s63 = sand.u32 %s40, 1
        %s64 = scalar_lea.sflag [#allocation6], %s63
        %s65 = sand.u32 %s40, 1
        %s66 = smul.addr %s65, 16
        %s67 = scalar_lea.vmem [#allocation5], %s66
        %s68 = smul.u32 2, %s26
        %s69 = smul.u32 %s26, 16
        %v70 = vlaneseq
        %v71 = vshrl.u32 %v70, 7
        %v72 = vadd.s32 %v71, 8
        %v73 = vstv %s69
        %v74 = vadd.s32 %v73, %v71
        %v75 = vadd.s32 %v73, %v72
        %v76 = vlaneseq
        %v77 = vand.u32 %v76, 127
        %v78 = vsub.s32 %v74, %v77
        %v79 = vsub.s32 %v75, %v77
        %vm80 = vcmp.lt.s32.totalorder %v78, 0
        %v81 = vsub.s32 0, %v78
        %v82 = vsel %vm80, %v81, %v78
        %vm83 = vcmp.lt.s32.totalorder %v79, 0
        %v84 = vsub.s32 0, %v79
        %v85 = vsel %vm83, %v84, %v79
        %v86 = vcvt.s32.f32 %v82
        %v87 = vcvt.s32.f32 %v85
        %v88 = vsub.f32 0.0, %v86
        %v89 = vsub.f32 0.0, %v87
        %s90 = sld [smem:[#allocation3 + %s25]]
        %s91 = sld [smem:[#allocation4 + %s25]]
        %s92 = sadd.s32 %s90, 1
        %s93 = sadd.s32 %s92, %s91
        %v94 = vstv %s90
        %vm95 = vcmp.lt.s32.totalorder %v74, %v94
        %vm96 = vcmp.lt.s32.totalorder %v75, %v94
        %v97 = vstv %s92
        %vm98 = vcmp.ge.s32.totalorder %v74, %v97
        %vm99 = vcmp.ge.s32.totalorder %v75, %v97
        %v100 = vstv %s93
        %vm101 = vcmp.lt.s32.totalorder %v74, %v100
        %vm102 = vcmp.lt.s32.totalorder %v75, %v100
        %vm103 = vmand %vm98, %vm101
        %vm104 = vmand %vm99, %vm102
        %v105 = vsel %vm103, 1, 4294967295
        %v106 = vsel %vm104, 1, 4294967295
        %v107 = vsel %vm95, 0, %v105
        %v108 = vsel %vm96, 0, %v106
        %vm109 = vcmp.lt.s32.totalorder %v77, %v94
        %vm110 = vcmp.ge.s32.totalorder %v77, %v97
        %vm111 = vcmp.lt.s32.totalorder %v77, %v100
        %vm112 = vmand %vm110, %vm111
        %v113 = vsel %vm112, 1, 4294967295
        %v114 = vsel %vm109, 0, %v113
        %vm115 = vcmp.ge.s32.totalorder %v107, 0
        %vm116 = vcmp.ge.s32.totalorder %v108, 0
        %vm117 = vcmp.eq.s32.totalorder %v107, %v114
        %vm118 = vcmp.eq.s32.totalorder %v108, %v114
        %v119 = vsel %vm115, 1, 0
        %v120 = vsel %vm116, 1, 0
        %vm121 = vcmp.eq.s32.totalorder %v119, 1
        %vm122 = vcmp.eq.s32.totalorder %v120, 1
        %vm123 = vmand %vm117, %vm121
        %vm124 = vmand %vm118, %vm122
        %v125 = vsel %vm123, %v88, -inf
        %v126 = vsel %vm124, %v89, -inf
        %127 = vst [vmem:[%s67] sm:$0xff] %v125
        %128 = vst [vmem:[%s67 + $0x8] sm:$0xff] %v126
        %s129 = sand.u32 %s40, 1
        %s130 = scalar_lea.sflag [#allocation6], %s129
        %s131 = sand.u32 %s40, 1
        %s132 = smul.addr %s131, 16
        %s133 = scalar_lea.vmem [#allocation5], %s132
        // Predicated region
        $region13: #{tpu_custom_call.1} parent=11 // pred_check
          %p134 = pneg %p46
        $region14: #{tpu_custom_call.1} parent=11 // pred_check_branch
          %136 = sbr.rel (%p134) target = $region16
        $region15: #{tpu_custom_call.1} parent=11 // pred_region
          %s137 = smul.u32 2, %s26
          %s139 = ssub.s32 256, 256
          %140 = vsyncadd %s130, %s139
          %s141 = smul.addr %s25, 2
          %s142 = sadd.s32 %s137, %s141
          %s143 = smul.addr %s142, 128
          %s144 = scalar_lea.hbm %s2, %s143
          %s145 = sshll.u32 %s133, 4
          %s146 = int_to_ptr.vmem [resolvable:$true] %s145
          %151 = dma.vmem_to_hbm [thread:$0]  %s146, 256, %s144, %s130, 128, 128, 8
        $region16: #{tpu_custom_call.1} parent=11 // pred_fallthru
          _
      $region12: #{tpu_custom_call.1} parent=5 // pred_fallthru
        _
      %p152 = scmp.le.s32.totalorder 1, %s19
      // Predicated region
      $region17: #{tpu_custom_call.1} parent=5 // pred_check
        %p153 = pneg %p152
      $region18: #{tpu_custom_call.1} parent=5 // pred_check_branch
        %155 = sbr.rel (%p153) target = $region20
      $region19: #{tpu_custom_call.1} parent=5 // pred_region
        %s156 = ssub.s32 %s19, 1
        // Predicated region
        $region21: #{tpu_custom_call.1} parent=19 // pred_check
          %p157 = pneg %p52
        $region22: #{tpu_custom_call.1} parent=19 // pred_check_branch
          %159 = sbr.rel (%p157) target = $region24
        $region23: #{tpu_custom_call.1} parent=19 // pred_region
          %s160 = sand.u32 %s43, 1
          %s161 = scalar_lea.sflag [#allocation6], %s160
          %s162 = sand.u32 %s43, 1
          %s163 = smul.addr %s162, 16
          %s164 = scalar_lea.vmem [#allocation5], %s163
          %165 = dma.done %s161, 256
        $region24: #{tpu_custom_call.1} parent=19 // pred_fallthru
          _
      $region20: #{tpu_custom_call.1} parent=5 // pred_fallthru
        _
    $region6: #{tpu_custom_call.1} parent=1 // loop_footer
      %s23 = sadd.s32 1, %s19
    $region7: #{tpu_custom_call.1} parent=1 // loop_footer_branch
      %18 = sbr.rel target = $region3
    $region8: #{tpu_custom_call.1} parent=1 // loop_exit
      _
    %166 = vsyncpa [#allocation6], 1
    %s167 = scalar_lea.sflag [#allocation6], 1
    %168 = vsyncpa %s167, 1

</llo_original>
